<compile_context>
chip_gen: v5e
topology: v5e:2x2
jax: 0.10.0
libtpu: 0.0.40
codegen_flags: <defaults>
</compile_context>

<pallas_src>
import jax
import jax.numpy as jnp
from jax.experimental import pallas as pl
from jax.experimental.pallas import tpu as pltpu

HIDDEN = 32
EMB_N = 16
EMB_T = 16
VOCAB_N = 24
VOCAB_T = 29            # -> output vocab = VOCAB_T + 3 = 32
NUM_LAYERS = 2
BATCH = 2
DROPOUT = 0.0
# TODO(synk): embedded_dropout with dropout>0 draws a Bernoulli row-mask (stochastic,
# training-only); with dropout=0.0 the forward semantics are reproduced exactly.


def _vmem_spec():
    return pl.BlockSpec(memory_space=pltpu.MemorySpace.VMEM)


def _lstm_cell_step(x, h_prev, c_prev, w_ih, w_hh, b):
    """Single-timestep LSTM cell.

    The gate matmul stays (B, 4H) = (B, 128) wide (one full-width MXU pass, good on the
    128-wide v5e MXU too); the nonlinearities are applied on the full gate vreg with a
    lane mask instead of four separate 32-lane sliced activations.
    """
    H = h_prev.shape[-1]
    gates = (jnp.dot(x, w_ih, preferred_element_type=jnp.float32)
             + jnp.dot(h_prev, w_hh, preferred_element_type=jnp.float32)
             + b)                                            # (B, 4H)
    lane = jax.lax.broadcasted_iota(jnp.int32, gates.shape, 1)
    is_g = (lane >= 2 * H) & (lane < 3 * H)                  # cell-candidate gate lanes
    act = jnp.where(is_g, jnp.tanh(gates), jax.nn.sigmoid(gates))
    i = act[:, 0 * H:1 * H]
    f = act[:, 1 * H:2 * H]
    g = act[:, 2 * H:3 * H]
    o = act[:, 3 * H:4 * H]
    c_new = f * c_prev + i * g
    h_new = o * jnp.tanh(c_new)
    return h_new, c_new


def fused_decoder_kernel(n_idx_ref, t_idx_ref, embN_ref, embT_ref,
                         h0_ref, c0_ref, hp_ref,
                         w_ih0_ref, w_hh0_ref, b0_ref,
                         w_ih1_ref, w_hh1_ref, b1_ref,
                         w_fold_ref, w_par_ref, bg_ref,
                         logp_ref, state_ref):
    B = hp_ref.shape[0]

    # ---- embedded_dropout (dropout=0): clamp OOR ids to padding_idx, one-hot @ table ----
    # (negative indices are not handled — PyTorch would raise; inputs assumed >= 0)
    def embed(idx_ref, table_ref, pad_idx):
        vocab = table_ref.shape[0]
        idx = idx_ref[...]                                   # (B, 1) int32
        idx = jnp.where(idx >= vocab, pad_idx, idx)          # PyTorch-style OOR clamp
        col = jax.lax.broadcasted_iota(jnp.int32, (B, vocab), 1)
        onehot = (col == idx).astype(jnp.float32)            # (B, vocab)
        return jnp.dot(onehot, table_ref[...], preferred_element_type=jnp.float32)

    n_emb = embed(n_idx_ref, embN_ref, VOCAB_N - 1)          # (B, EMB_N)
    t_emb = embed(t_idx_ref, embT_ref, VOCAB_T - 1)          # (B, EMB_T)
    x = jnp.concatenate([n_emb, t_emb], axis=1)              # (B, EMB_N + EMB_T)

    # ---- stacked single-step LSTM ----
    layer_w = [(w_ih0_ref, w_hh0_ref, b0_ref),
               (w_ih1_ref, w_hh1_ref, b1_ref)]
    layer_in = x
    packed = []
    for l, (wih, whh, b) in enumerate(layer_w):
        h_new, c_new = _lstm_cell_step(layer_in, h0_ref[l], c0_ref[l],
                                       wih[...], whh[...], b[...])
        packed += [h_new, c_new]
        layer_in = h_new

    h_top = layer_in                                         # hidden == out for a 1-step LSTM

    # ---- head: Linear(3H -> V) over [hidden, out, h_parent] + log_softmax ----
    # hidden == out, so their two weight blocks were pre-summed into w_fold (wrapper side).
    logits = (jnp.dot(h_top, w_fold_ref[...], preferred_element_type=jnp.float32)
              + jnp.dot(hp_ref[...], w_par_ref[...], preferred_element_type=jnp.float32)
              + bg_ref[...])                                 # (B, V)
    m = jnp.max(logits, axis=-1, keepdims=True)
    lse = jnp.log(jnp.sum(jnp.exp(logits - m), axis=-1, keepdims=True)) + m
    logp_ref[...] = logits - lse

    # ---- lane-dense packed state store: [h0 | c0 | h1 | c1] -> (B, 2*L*H) = (B, 128) ----
    state_ref[...] = jnp.concatenate(packed, axis=1)


def _fused_call(n_idx, t_idx, params, h0, c0, h_parent):
    B, H = h_parent.shape
    V = params['b_global'].shape[-1]
    inputs = (n_idx, t_idx, params['embN'], params['embT'], h0, c0, h_parent,
              params['lstm'][0]['w_ih_t'], params['lstm'][0]['w_hh_t'], params['lstm'][0]['b'],
              params['lstm'][1]['w_ih_t'], params['lstm'][1]['w_hh_t'], params['lstm'][1]['b'],
              params['w_fold'], params['w_par'], params['b_global'])
    logp, state = pl.pallas_call(
        fused_decoder_kernel,
        out_shape=[jax.ShapeDtypeStruct((B, V), jnp.float32),
                   jax.ShapeDtypeStruct((B, 2 * NUM_LAYERS * H), jnp.float32)],
        in_specs=[_vmem_spec() for _ in inputs],
        out_specs=[_vmem_spec(), _vmem_spec()],
    )(*inputs)
    return logp, state


# ----------------------------- parameter init ---------------------------------
def init_params(key):
    ks = jax.random.split(key, 16)
    H = HIDDEN
    params = {}
    embN = jax.random.normal(ks[0], (VOCAB_N, EMB_N), jnp.float32)
    embN = embN.at[VOCAB_N - 1].set(0.0)               # padding_idx row zeroed
    embT = jax.random.normal(ks[1], (VOCAB_T + 3, EMB_T), jnp.float32)
    embT = embT.at[VOCAB_T - 1].set(0.0)               # padding_idx row zeroed
    params['embN'] = embN
    params['embT'] = embT
    k = 2
    lstm = []
    stdv = 1.0 / (H ** 0.5)
    for layer in range(NUM_LAYERS):
        in_sz = (EMB_N + EMB_T) if layer == 0 else H
        w_ih = jax.random.uniform(ks[k], (4 * H, in_sz), jnp.float32, -stdv, stdv); k += 1
        w_hh = jax.random.uniform(ks[k], (4 * H, H), jnp.float32, -stdv, stdv); k += 1
        b_ih = jax.random.uniform(ks[k], (4 * H,), jnp.float32, -stdv, stdv); k += 1
        b_hh = jax.random.uniform(ks[k], (4 * H,), jnp.float32, -stdv, stdv); k += 1
        # pre-transpose for the kernel: gates = x @ w_ih.T + h @ w_hh.T + (b_ih + b_hh)
        lstm.append({'w_ih_t': w_ih.T, 'w_hh_t': w_hh.T,
                     'b': (b_ih + b_hh).reshape(1, 4 * H)})
    params['lstm'] = lstm
    V = VOCAB_T + 3
    stdv_l = 1.0 / ((3 * H) ** 0.5)
    w_g = jax.random.uniform(ks[k], (V, 3 * H), jnp.float32, -stdv_l, stdv_l); k += 1
    b_g = jax.random.uniform(ks[k], (V,), jnp.float32, -stdv_l, stdv_l); k += 1
    # fold the "hidden" and "out" blocks (identical activations for a 1-step LSTM)
    params['w_fold'] = (w_g[:, 0 * H:1 * H] + w_g[:, 1 * H:2 * H]).T   # (H, V)
    params['w_par'] = w_g[:, 2 * H:3 * H].T                            # (H, V)
    params['b_global'] = b_g.reshape(1, V)
    return params


# ------------------------------- forward --------------------------------------
def decoder_simple_forward(params, n_input, t_input, hc, enc_out, mask, h_parent):
    # enc_out and mask are unused by DecoderSimple.forward (kept for signature fidelity).
    del enc_out, mask
    B = n_input.shape[0]
    H = HIDDEN
    n_idx = n_input.astype(jnp.int32).reshape(B, 1)
    t_idx = t_input.astype(jnp.int32).reshape(B, 1)
    h0, c0 = hc                                         # each (L, B, H)
    logp, state = _fused_call(n_idx, t_idx, params, h0, c0, h_parent)
    # unpack the lane-dense state slab: (B, L*2*H) -> h, c each (L, B, H)
    state = state.reshape(B, NUM_LAYERS, 2, H)
    h = jnp.transpose(state[:, :, 0, :], (1, 0, 2))
    c = jnp.transpose(state[:, :, 1, :], (1, 0, 2))
    return logp, (h, c)


if __name__ == "__main__":
    key = jax.random.PRNGKey(0)
    kp, k1, k2, k3, k4, k5 = jax.random.split(key, 6)
    params = init_params(kp)

    n_input = jax.random.randint(k1, (BATCH,), 0, VOCAB_N)
    t_input = jax.random.randint(k2, (BATCH,), 0, VOCAB_T + 3)
    h0 = jax.random.normal(k3, (NUM_LAYERS, BATCH, HIDDEN), jnp.float32)
    c0 = jax.random.normal(k4, (NUM_LAYERS, BATCH, HIDDEN), jnp.float32)
    h_parent = jax.random.normal(k5, (BATCH, HIDDEN), jnp.float32)
    enc_out = jnp.zeros((BATCH, 8, HIDDEN), jnp.float32)   # unused in forward
    mask = jnp.zeros((BATCH, 8), jnp.float32)               # unused in forward

    fwd = jax.jit(decoder_simple_forward)
    w_t, (h, c) = fwd(params, n_input, t_input, (h0, c0), enc_out, mask, h_parent)
    jax.block_until_ready((w_t, h, c))

    assert w_t.shape == (BATCH, VOCAB_T + 3)
    assert h.shape == (NUM_LAYERS, BATCH, HIDDEN)
    assert c.shape == (NUM_LAYERS, BATCH, HIDDEN)
    # log_softmax rows must exponentiate-sum to 1
    assert bool(jnp.allclose(jnp.sum(jnp.exp(w_t), axis=1), 1.0, atol=1e-4))
    print("KERNEL_OK")
</pallas_src>

<mosaic_0001>
module attributes {stable_mosaic.version = 11 : i64} {
  func.func @fused_decoder_kernel(%arg0: memref<2x1xi32, #tpu.memory_space<vmem>>, %arg1: memref<2x1xi32, #tpu.memory_space<vmem>>, %arg2: memref<24x16xf32, #tpu.memory_space<vmem>>, %arg3: memref<32x16xf32, #tpu.memory_space<vmem>>, %arg4: memref<2x2x32xf32, #tpu.memory_space<vmem>>, %arg5: memref<2x2x32xf32, #tpu.memory_space<vmem>>, %arg6: memref<2x32xf32, #tpu.memory_space<vmem>>, %arg7: memref<32x128xf32, #tpu.memory_space<vmem>>, %arg8: memref<32x128xf32, #tpu.memory_space<vmem>>, %arg9: memref<1x128xf32, #tpu.memory_space<vmem>>, %arg10: memref<32x128xf32, #tpu.memory_space<vmem>>, %arg11: memref<32x128xf32, #tpu.memory_space<vmem>>, %arg12: memref<1x128xf32, #tpu.memory_space<vmem>>, %arg13: memref<32x32xf32, #tpu.memory_space<vmem>>, %arg14: memref<32x32xf32, #tpu.memory_space<vmem>>, %arg15: memref<1x32xf32, #tpu.memory_space<vmem>>, %arg16: memref<2x32xf32, #tpu.memory_space<vmem>>, %arg17: memref<2x128xf32, #tpu.memory_space<vmem>>) attributes {dimension_semantics = [], scalar_prefetch = 0 : i64, scratch_operands = 0 : i64, tpu.core_type = #tpu.core_type<tc>} {
    %c0 = arith.constant 0 : index
    %c0_0 = arith.constant 0 : index
    %0 = vector.load %arg0[%c0, %c0_0] : memref<2x1xi32, #tpu.memory_space<vmem>>, vector<2x1xi32>
    %c24_i32 = arith.constant 24 : i32
    %1 = vector.broadcast %c24_i32 : i32 to vector<2x1xi32>
    %2 = arith.cmpi sge, %0, %1 : vector<2x1xi32>
    %c23_i32 = arith.constant 23 : i32
    %3 = vector.broadcast %c23_i32 : i32 to vector<2x1xi32>
    %4 = arith.select %2, %3, %0 : vector<2x1xi1>, vector<2x1xi32>
    %5 = tpu.iota {dimensions = array<i32: 1>} : vector<2x24xi32>
    %6 = vector.broadcast %4 : vector<2x1xi32> to vector<2x24xi32>
    %7 = arith.cmpi eq, %5, %6 : vector<2x24xi32>
    %8 = arith.extui %7 : vector<2x24xi1> to vector<2x24xi32>
    %9 = arith.sitofp %8 : vector<2x24xi32> to vector<2x24xf32>
    %c0_1 = arith.constant 0 : index
    %c0_2 = arith.constant 0 : index
    %10 = vector.load %arg2[%c0_1, %c0_2] : memref<24x16xf32, #tpu.memory_space<vmem>>, vector<24x16xf32>
    %cst = arith.constant dense<0.000000e+00> : vector<2x16xf32>
    %11 = tpu.matmul %9, %10, %cst {dimension_numbers = #tpu.dot_dimension_numbers<[1], [0], [0], [1], [0, 0, 1, 1], [], []>} : vector<2x24xf32>, vector<24x16xf32>, vector<2x16xf32> -> vector<2x16xf32>
    %c0_3 = arith.constant 0 : index
    %c0_4 = arith.constant 0 : index
    %12 = vector.load %arg1[%c0_3, %c0_4] : memref<2x1xi32, #tpu.memory_space<vmem>>, vector<2x1xi32>
    %c32_i32 = arith.constant 32 : i32
    %13 = vector.broadcast %c32_i32 : i32 to vector<2x1xi32>
    %14 = arith.cmpi sge, %12, %13 : vector<2x1xi32>
    %c28_i32 = arith.constant 28 : i32
    %15 = vector.broadcast %c28_i32 : i32 to vector<2x1xi32>
    %16 = arith.select %14, %15, %12 : vector<2x1xi1>, vector<2x1xi32>
    %17 = tpu.iota {dimensions = array<i32: 1>} : vector<2x32xi32>
    %18 = vector.broadcast %16 : vector<2x1xi32> to vector<2x32xi32>
    %19 = arith.cmpi eq, %17, %18 : vector<2x32xi32>
    %20 = arith.extui %19 : vector<2x32xi1> to vector<2x32xi32>
    %21 = arith.sitofp %20 : vector<2x32xi32> to vector<2x32xf32>
    %c0_5 = arith.constant 0 : index
    %c0_6 = arith.constant 0 : index
    %22 = vector.load %arg3[%c0_5, %c0_6] : memref<32x16xf32, #tpu.memory_space<vmem>>, vector<32x16xf32>
    %cst_7 = arith.constant dense<0.000000e+00> : vector<2x16xf32>
    %23 = tpu.matmul %21, %22, %cst_7 {dimension_numbers = #tpu.dot_dimension_numbers<[1], [0], [0], [1], [0, 0, 1, 1], [], []>} : vector<2x32xf32>, vector<32x16xf32>, vector<2x16xf32> -> vector<2x16xf32>
    %24 = tpu.concatenate %11, %23 in 1 : vector<2x16xf32>, vector<2x16xf32> -> vector<2x32xf32>
    %c0_8 = arith.constant 0 : index
    %c0_9 = arith.constant 0 : index
    %c0_10 = arith.constant 0 : index
    %25 = vector.load %arg4[%c0_8, %c0_9, %c0_10] : memref<2x2x32xf32, #tpu.memory_space<vmem>>, vector<1x2x32xf32>
    %26 = vector.shape_cast %25 : vector<1x2x32xf32> to vector<2x32xf32>
    %c0_11 = arith.constant 0 : index
    %c0_12 = arith.constant 0 : index
    %c0_13 = arith.constant 0 : index
    %27 = vector.load %arg5[%c0_11, %c0_12, %c0_13] : memref<2x2x32xf32, #tpu.memory_space<vmem>>, vector<1x2x32xf32>
    %28 = vector.shape_cast %27 : vector<1x2x32xf32> to vector<2x32xf32>
    %c0_14 = arith.constant 0 : index
    %c0_15 = arith.constant 0 : index
    %29 = vector.load %arg7[%c0_14, %c0_15] : memref<32x128xf32, #tpu.memory_space<vmem>>, vector<32x128xf32>
    %c0_16 = arith.constant 0 : index
    %c0_17 = arith.constant 0 : index
    %30 = vector.load %arg8[%c0_16, %c0_17] : memref<32x128xf32, #tpu.memory_space<vmem>>, vector<32x128xf32>
    %c0_18 = arith.constant 0 : index
    %c0_19 = arith.constant 0 : index
    %31 = vector.load %arg9[%c0_18, %c0_19] : memref<1x128xf32, #tpu.memory_space<vmem>>, vector<1x128xf32>
    %cst_20 = arith.constant dense<0.000000e+00> : vector<2x128xf32>
    %32 = tpu.matmul %24, %29, %cst_20 {dimension_numbers = #tpu.dot_dimension_numbers<[1], [0], [0], [1], [0, 0, 1, 1], [], []>} : vector<2x32xf32>, vector<32x128xf32>, vector<2x128xf32> -> vector<2x128xf32>
    %cst_21 = arith.constant dense<0.000000e+00> : vector<2x128xf32>
    %33 = tpu.matmul %26, %30, %cst_21 {dimension_numbers = #tpu.dot_dimension_numbers<[1], [0], [0], [1], [0, 0, 1, 1], [], []>} : vector<2x32xf32>, vector<32x128xf32>, vector<2x128xf32> -> vector<2x128xf32>
    %34 = arith.addf %32, %33 : vector<2x128xf32>
    %35 = vector.broadcast %31 : vector<1x128xf32> to vector<2x128xf32>
    %36 = arith.addf %34, %35 : vector<2x128xf32>
    %37 = tpu.iota {dimensions = array<i32: 1>} : vector<2x128xi32>
    %c64_i32 = arith.constant 64 : i32
    %38 = vector.broadcast %c64_i32 : i32 to vector<2x128xi32>
    %39 = arith.cmpi sge, %37, %38 : vector<2x128xi32>
    %c96_i32 = arith.constant 96 : i32
    %40 = vector.broadcast %c96_i32 : i32 to vector<2x128xi32>
    %41 = arith.cmpi slt, %37, %40 : vector<2x128xi32>
    %42 = arith.andi %39, %41 : vector<2x128xi1>
    %43 = math.tanh %36 : vector<2x128xf32>
    %44 = arith.negf %36 : vector<2x128xf32>
    %45 = math.exp %44 : vector<2x128xf32>
    %cst_22 = arith.constant 1.000000e+00 : f32
    %46 = vector.broadcast %cst_22 : f32 to vector<2x128xf32>
    %47 = arith.addf %46, %45 : vector<2x128xf32>
    %48 = arith.divf %46, %47 : vector<2x128xf32>
    %49 = arith.select %42, %43, %48 : vector<2x128xi1>, vector<2x128xf32>
    %50 = vector.extract_strided_slice %49 {offsets = [0, 0], sizes = [2, 32], strides = [1, 1]} : vector<2x128xf32> to vector<2x32xf32>
    %51 = vector.extract_strided_slice %49 {offsets = [0, 32], sizes = [2, 32], strides = [1, 1]} : vector<2x128xf32> to vector<2x32xf32>
    %52 = vector.extract_strided_slice %49 {offsets = [0, 64], sizes = [2, 32], strides = [1, 1]} : vector<2x128xf32> to vector<2x32xf32>
    %53 = vector.extract_strided_slice %49 {offsets = [0, 96], sizes = [2, 32], strides = [1, 1]} : vector<2x128xf32> to vector<2x32xf32>
    %54 = arith.mulf %51, %28 : vector<2x32xf32>
    %55 = arith.mulf %50, %52 : vector<2x32xf32>
    %56 = arith.addf %54, %55 : vector<2x32xf32>
    %57 = math.tanh %56 : vector<2x32xf32>
    %58 = arith.mulf %53, %57 : vector<2x32xf32>
    %c1 = arith.constant 1 : index
    %c0_23 = arith.constant 0 : index
    %c0_24 = arith.constant 0 : index
    %59 = vector.load %arg4[%c1, %c0_23, %c0_24] : memref<2x2x32xf32, #tpu.memory_space<vmem>>, vector<1x2x32xf32>
    %60 = vector.shape_cast %59 : vector<1x2x32xf32> to vector<2x32xf32>
    %c1_25 = arith.constant 1 : index
    %c0_26 = arith.constant 0 : index
    %c0_27 = arith.constant 0 : index
    %61 = vector.load %arg5[%c1_25, %c0_26, %c0_27] : memref<2x2x32xf32, #tpu.memory_space<vmem>>, vector<1x2x32xf32>
    %62 = vector.shape_cast %61 : vector<1x2x32xf32> to vector<2x32xf32>
    %c0_28 = arith.constant 0 : index
    %c0_29 = arith.constant 0 : index
    %63 = vector.load %arg10[%c0_28, %c0_29] : memref<32x128xf32, #tpu.memory_space<vmem>>, vector<32x128xf32>
    %c0_30 = arith.constant 0 : index
    %c0_31 = arith.constant 0 : index
    %64 = vector.load %arg11[%c0_30, %c0_31] : memref<32x128xf32, #tpu.memory_space<vmem>>, vector<32x128xf32>
    %c0_32 = arith.constant 0 : index
    %c0_33 = arith.constant 0 : index
    %65 = vector.load %arg12[%c0_32, %c0_33] : memref<1x128xf32, #tpu.memory_space<vmem>>, vector<1x128xf32>
    %cst_34 = arith.constant dense<0.000000e+00> : vector<2x128xf32>
    %66 = tpu.matmul %58, %63, %cst_34 {dimension_numbers = #tpu.dot_dimension_numbers<[1], [0], [0], [1], [0, 0, 1, 1], [], []>} : vector<2x32xf32>, vector<32x128xf32>, vector<2x128xf32> -> vector<2x128xf32>
    %cst_35 = arith.constant dense<0.000000e+00> : vector<2x128xf32>
    %67 = tpu.matmul %60, %64, %cst_35 {dimension_numbers = #tpu.dot_dimension_numbers<[1], [0], [0], [1], [0, 0, 1, 1], [], []>} : vector<2x32xf32>, vector<32x128xf32>, vector<2x128xf32> -> vector<2x128xf32>
    %68 = arith.addf %66, %67 : vector<2x128xf32>
    %69 = vector.broadcast %65 : vector<1x128xf32> to vector<2x128xf32>
    %70 = arith.addf %68, %69 : vector<2x128xf32>
    %71 = tpu.iota {dimensions = array<i32: 1>} : vector<2x128xi32>
    %c64_i32_36 = arith.constant 64 : i32
    %72 = vector.broadcast %c64_i32_36 : i32 to vector<2x128xi32>
    %73 = arith.cmpi sge, %71, %72 : vector<2x128xi32>
    %c96_i32_37 = arith.constant 96 : i32
    %74 = vector.broadcast %c96_i32_37 : i32 to vector<2x128xi32>
    %75 = arith.cmpi slt, %71, %74 : vector<2x128xi32>
    %76 = arith.andi %73, %75 : vector<2x128xi1>
    %77 = math.tanh %70 : vector<2x128xf32>
    %78 = arith.negf %70 : vector<2x128xf32>
    %79 = math.exp %78 : vector<2x128xf32>
    %cst_38 = arith.constant 1.000000e+00 : f32
    %80 = vector.broadcast %cst_38 : f32 to vector<2x128xf32>
    %81 = arith.addf %80, %79 : vector<2x128xf32>
    %82 = arith.divf %80, %81 : vector<2x128xf32>
    %83 = arith.select %76, %77, %82 : vector<2x128xi1>, vector<2x128xf32>
    %84 = vector.extract_strided_slice %83 {offsets = [0, 0], sizes = [2, 32], strides = [1, 1]} : vector<2x128xf32> to vector<2x32xf32>
    %85 = vector.extract_strided_slice %83 {offsets = [0, 32], sizes = [2, 32], strides = [1, 1]} : vector<2x128xf32> to vector<2x32xf32>
    %86 = vector.extract_strided_slice %83 {offsets = [0, 64], sizes = [2, 32], strides = [1, 1]} : vector<2x128xf32> to vector<2x32xf32>
    %87 = vector.extract_strided_slice %83 {offsets = [0, 96], sizes = [2, 32], strides = [1, 1]} : vector<2x128xf32> to vector<2x32xf32>
    %88 = arith.mulf %85, %62 : vector<2x32xf32>
    %89 = arith.mulf %84, %86 : vector<2x32xf32>
    %90 = arith.addf %88, %89 : vector<2x32xf32>
    %91 = math.tanh %90 : vector<2x32xf32>
    %92 = arith.mulf %87, %91 : vector<2x32xf32>
    %c0_39 = arith.constant 0 : index
    %c0_40 = arith.constant 0 : index
    %93 = vector.load %arg13[%c0_39, %c0_40] : memref<32x32xf32, #tpu.memory_space<vmem>>, vector<32x32xf32>
    %cst_41 = arith.constant dense<0.000000e+00> : vector<2x32xf32>
    %94 = tpu.matmul %92, %93, %cst_41 {dimension_numbers = #tpu.dot_dimension_numbers<[1], [0], [0], [1], [0, 0, 1, 1], [], []>} : vector<2x32xf32>, vector<32x32xf32>, vector<2x32xf32> -> vector<2x32xf32>
    %c0_42 = arith.constant 0 : index
    %c0_43 = arith.constant 0 : index
    %95 = vector.load %arg6[%c0_42, %c0_43] : memref<2x32xf32, #tpu.memory_space<vmem>>, vector<2x32xf32>
    %c0_44 = arith.constant 0 : index
    %c0_45 = arith.constant 0 : index
    %96 = vector.load %arg14[%c0_44, %c0_45] : memref<32x32xf32, #tpu.memory_space<vmem>>, vector<32x32xf32>
    %cst_46 = arith.constant dense<0.000000e+00> : vector<2x32xf32>
    %97 = tpu.matmul %95, %96, %cst_46 {dimension_numbers = #tpu.dot_dimension_numbers<[1], [0], [0], [1], [0, 0, 1, 1], [], []>} : vector<2x32xf32>, vector<32x32xf32>, vector<2x32xf32> -> vector<2x32xf32>
    %98 = arith.addf %94, %97 : vector<2x32xf32>
    %c0_47 = arith.constant 0 : index
    %c0_48 = arith.constant 0 : index
    %99 = vector.load %arg15[%c0_47, %c0_48] : memref<1x32xf32, #tpu.memory_space<vmem>>, vector<1x32xf32>
    %100 = vector.broadcast %99 : vector<1x32xf32> to vector<2x32xf32>
    %101 = arith.addf %98, %100 : vector<2x32xf32>
    %cst_49 = arith.constant dense<0xFF800000> : vector<2xf32>
    %102 = vector.multi_reduction <maximumf>, %101, %cst_49 [1] : vector<2x32xf32> to vector<2xf32>
    %103 = vector.shape_cast %102 : vector<2xf32> to vector<2x1xf32>
    %104 = vector.broadcast %103 : vector<2x1xf32> to vector<2x32xf32>
    %105 = arith.subf %101, %104 : vector<2x32xf32>
    %106 = math.exp %105 : vector<2x32xf32>
    %cst_50 = arith.constant dense<0.000000e+00> : vector<2xf32>
    %107 = vector.multi_reduction <add>, %106, %cst_50 [1] : vector<2x32xf32> to vector<2xf32>
    %108 = vector.shape_cast %107 : vector<2xf32> to vector<2x1xf32>
    %109 = math.log %108 : vector<2x1xf32>
    %110 = arith.addf %109, %103 : vector<2x1xf32>
    %111 = vector.broadcast %110 : vector<2x1xf32> to vector<2x32xf32>
    %112 = arith.subf %101, %111 : vector<2x32xf32>
    %c0_51 = arith.constant 0 : index
    %c0_52 = arith.constant 0 : index
    %113 = vector.load %arg16[%c0_51, %c0_52] : memref<2x32xf32, #tpu.memory_space<vmem>>, vector<2x32xf32>
    tpu.vector_store %arg16[%c0_51, %c0_52], %112 {strides = array<i32>} : memref<2x32xf32, #tpu.memory_space<vmem>>, vector<2x32xf32>,
    %114 = tpu.concatenate %58, %56, %92, %90 in 1 : vector<2x32xf32>, vector<2x32xf32>, vector<2x32xf32>, vector<2x32xf32> -> vector<2x128xf32>
    %c0_53 = arith.constant 0 : index
    %c0_54 = arith.constant 0 : index
    %115 = vector.load %arg17[%c0_53, %c0_54] : memref<2x128xf32, #tpu.memory_space<vmem>>, vector<2x128xf32>
    tpu.vector_store %arg17[%c0_53, %c0_54], %114 {strides = array<i32>} : memref<2x128xf32, #tpu.memory_space<vmem>>, vector<2x128xf32>,
    return
  }
}

</mosaic_0001>

<llo_original>
// kernel: decoder_simple_forward.1
$region0: #{decoder_simple_forward.1}
  #allocation0 [shape = 'u32[]', space=smem, size = 0x4, offset = 0x4, fixed_abs, tag = 'smem constant byte address 0x4 - core index']
  #allocation1 [shape = 'u32[72,128]{1,0:T(1,128)}', space=vmem, size = 0x9000, scoped, tag = 'internal scratch']
  %s0 = inlined_call_operand.vmem [shape: s32[2,1], index: 0, kind: input, shape index: {}]
  %s1 = inlined_call_operand.vmem [shape: s32[2,1], index: 1, kind: input, shape index: {}]
  %s2 = inlined_call_operand.vmem [shape: f32[24,16], index: 2, kind: input, shape index: {}]
  %s3 = inlined_call_operand.vmem [shape: f32[32,16], index: 3, kind: input, shape index: {}]
  %s4 = inlined_call_operand.vmem [shape: f32[2,2,32], index: 4, kind: input, shape index: {}]
  %s5 = inlined_call_operand.vmem [shape: f32[2,2,32], index: 5, kind: input, shape index: {}]
  %s6 = inlined_call_operand.vmem [shape: f32[2,32], index: 6, kind: input, shape index: {}]
  %s7 = inlined_call_operand.vmem [shape: f32[32,128], index: 7, kind: input, shape index: {}]
  %s8 = inlined_call_operand.vmem [shape: f32[32,128], index: 8, kind: input, shape index: {}]
  %s9 = inlined_call_operand.vmem [shape: f32[1,128], index: 9, kind: input, shape index: {}]
  %s10 = inlined_call_operand.hbm [shape: f32[32,128], index: 10, kind: input, shape index: {}]
  %s11 = inlined_call_operand.hbm [shape: f32[32,128], index: 11, kind: input, shape index: {}]
  %s12 = inlined_call_operand.vmem [shape: f32[1,128], index: 12, kind: input, shape index: {}]
  %s13 = inlined_call_operand.hbm [shape: f32[32,32], index: 13, kind: input, shape index: {}]
  %s14 = inlined_call_operand.hbm [shape: f32[32,32], index: 14, kind: input, shape index: {}]
  %s15 = inlined_call_operand.vmem [shape: f32[1,32], index: 15, kind: input, shape index: {}]
  %s16 = inlined_call_operand.hbm [shape: f32[2,32], index: 16, kind: output, shape index: {0}]
  %s17 = inlined_call_operand.vmem [shape: f32[2,128], index: 17, kind: output, shape index: {1}]
  %18 = xla_tuple %s16, %s17
  %s19 = sld [smem:[#allocation0]]
  $region98: #{decoder_simple_forward.1} parent=0
    _
  %s21 = ssub.s32 1, %s19
  %s22 = scalar_select 0, %s21, %s19
  $region1: #{decoder_simple_forward.1} parent=0
    #allocation2 [shape = 'u8[16384]{0}', space=vmem, size = 0x4000, scoped, tag = 'input window, operand 10, single buffered']
    #allocation3 [shape = 's32[1]{0}', space=sflag, size = 0x4, scoped, tag = 'scoped memory for decoder_simple_forward.1']
    #allocation4 [shape = 's32[1]{0}', space=sflag, size = 0x4, scoped, tag = 'scoped memory for decoder_simple_forward.1']
    #allocation5 [shape = 'u8[16384]{0}', space=vmem, size = 0x4000, scoped, tag = 'input window, operand 11, single buffered']
    #allocation6 [shape = 's32[1]{0}', space=sflag, size = 0x4, scoped, tag = 'scoped memory for decoder_simple_forward.1']
    #allocation7 [shape = 'u8[16384]{0}', space=vmem, size = 0x4000, scoped, tag = 'input window, operand 13, single buffered']
    #allocation8 [shape = 'u8[16384]{0}', space=vmem, size = 0x4000, scoped, tag = 'input window, operand 14, single buffered']
    #allocation9 [shape = 's32[1]{0}', space=sflag, size = 0x4, scoped, tag = 'scoped memory for decoder_simple_forward.1']
    #allocation10 [shape = 'u8[1024]{0}', space=vmem, size = 0x400, scoped, tag = 'output window, operand 0, single buffered']
    %23 = vsyncpa [#allocation3], 0
    %24 = vsyncpa [#allocation6], 0
    %25 = vsyncpa [#allocation9], 0
    %26 = vsyncpa [#allocation4], 0
    // Predicated region
    $region2: #{decoder_simple_forward.1} parent=1 // pred_check
      _
    $region3: #{decoder_simple_forward.1} parent=1 // pred_check_branch
      %28 = sbr.rel (0) target = $region5
    $region4: #{decoder_simple_forward.1} parent=1 // pred_region
      _
    $region5: #{decoder_simple_forward.1} parent=1 // pred_fallthru
      _
    // Predicated region
    $region6: #{decoder_simple_forward.1} parent=1 // pred_check
      _
    $region7: #{decoder_simple_forward.1} parent=1 // pred_check_branch
      %30 = sbr.rel (0) target = $region9
    $region8: #{decoder_simple_forward.1} parent=1 // pred_region
      _
    $region9: #{decoder_simple_forward.1} parent=1 // pred_fallthru
      _
    // Predicated region
    $region10: #{decoder_simple_forward.1} parent=1 // pred_check
      _
    $region11: #{decoder_simple_forward.1} parent=1 // pred_check_branch
      %32 = sbr.rel (0) target = $region13
    $region12: #{decoder_simple_forward.1} parent=1 // pred_region
      _
    $region13: #{decoder_simple_forward.1} parent=1 // pred_fallthru
      _
    // Predicated region
    $region14: #{decoder_simple_forward.1} parent=1 // pred_check
      _
    $region15: #{decoder_simple_forward.1} parent=1 // pred_check_branch
      %34 = sbr.rel (0) target = $region17
    $region16: #{decoder_simple_forward.1} parent=1 // pred_region
      _
    $region17: #{decoder_simple_forward.1} parent=1 // pred_fallthru
      _
    // Predicated region
    $region18: #{decoder_simple_forward.1} parent=1 // pred_check
      _
    $region19: #{decoder_simple_forward.1} parent=1 // pred_check_branch
      %36 = sbr.rel (0) target = $region21
    $region20: #{decoder_simple_forward.1} parent=1 // pred_region
      _
    $region21: #{decoder_simple_forward.1} parent=1 // pred_fallthru
      _
    // Predicated region
    $region22: #{decoder_simple_forward.1} parent=1 // pred_check
      _
    $region23: #{decoder_simple_forward.1} parent=1 // pred_check_branch
      %38 = sbr.rel (0) target = $region25
    $region24: #{decoder_simple_forward.1} parent=1 // pred_region
      _
    $region25: #{decoder_simple_forward.1} parent=1 // pred_fallthru
      _
    // Predicated region
    $region26: #{decoder_simple_forward.1} parent=1 // pred_check
      _
    $region27: #{decoder_simple_forward.1} parent=1 // pred_check_branch
      %40 = sbr.rel (0) target = $region29
    $region28: #{decoder_simple_forward.1} parent=1 // pred_region
      _
    $region29: #{decoder_simple_forward.1} parent=1 // pred_fallthru
      _
    // Predicated region
    $region30: #{decoder_simple_forward.1} parent=1 // pred_check
      _
    $region31: #{decoder_simple_forward.1} parent=1 // pred_check_branch
      %42 = sbr.rel (0) target = $region33
    $region32: #{decoder_simple_forward.1} parent=1 // pred_region
      _
    $region33: #{decoder_simple_forward.1} parent=1 // pred_fallthru
      _
    // Predicated region
    $region34: #{decoder_simple_forward.1} parent=1 // pred_check
      _
    $region35: #{decoder_simple_forward.1} parent=1 // pred_check_branch
      %44 = sbr.rel (0) target = $region37
    $region36: #{decoder_simple_forward.1} parent=1 // pred_region
      _
    $region37: #{decoder_simple_forward.1} parent=1 // pred_fallthru
      _
    // Predicated region
    $region38: #{decoder_simple_forward.1} parent=1 // pred_check
      _
    $region39: #{decoder_simple_forward.1} parent=1 // pred_check_branch
      %46 = sbr.rel (0) target = $region41
    $region40: #{decoder_simple_forward.1} parent=1 // pred_region
      _
    $region41: #{decoder_simple_forward.1} parent=1 // pred_fallthru
      _
    // Predicated region
    $region42: #{decoder_simple_forward.1} parent=1 // pred_check
      _
    $region43: #{decoder_simple_forward.1} parent=1 // pred_check_branch
      %48 = sbr.rel (0) target = $region45
    $region44: #{decoder_simple_forward.1} parent=1 // pred_region
      %50 = vsyncadd [#allocation3], 0
      %s51 = sshll.u32 %s10, 4
      %s52 = int_to_ptr.hbm [resolvable:$true] %s51
      %s53 = sshll.u32 [#allocation2], 4
      %s54 = int_to_ptr.vmem [resolvable:$true] %s53
      %59 = dma.hbm_to_vmem [thread:$0]  %s52, 512, %s54, [#allocation3], 128, 128, 8
    $region45: #{decoder_simple_forward.1} parent=1 // pred_fallthru
      _
    // Predicated region
    $region46: #{decoder_simple_forward.1} parent=1 // pred_check
      _
    $region47: #{decoder_simple_forward.1} parent=1 // pred_check_branch
      %61 = sbr.rel (0) target = $region49
    $region48: #{decoder_simple_forward.1} parent=1 // pred_region
      %63 = vsyncadd [#allocation6], 0
      %s64 = sshll.u32 %s11, 4
      %s65 = int_to_ptr.hbm [resolvable:$true] %s64
      %s66 = sshll.u32 [#allocation5], 4
      %s67 = int_to_ptr.vmem [resolvable:$true] %s66
      %72 = dma.hbm_to_vmem [thread:$0]  %s65, 512, %s67, [#allocation6], 128, 128, 8
    $region49: #{decoder_simple_forward.1} parent=1 // pred_fallthru
      _
    // Predicated region
    $region50: #{decoder_simple_forward.1} parent=1 // pred_check
      _
    $region51: #{decoder_simple_forward.1} parent=1 // pred_check_branch
      %74 = sbr.rel (0) target = $region53
    $region52: #{decoder_simple_forward.1} parent=1 // pred_region
      _
    $region53: #{decoder_simple_forward.1} parent=1 // pred_fallthru
      _
    // Predicated region
    $region54: #{decoder_simple_forward.1} parent=1 // pred_check
      _
    $region55: #{decoder_simple_forward.1} parent=1 // pred_check_branch
      %76 = sbr.rel (0) target = $region57
    $region56: #{decoder_simple_forward.1} parent=1 // pred_region
      %78 = vsyncadd [#allocation6], 0
      %s79 = sshll.u32 %s13, 4
      %s80 = int_to_ptr.hbm [resolvable:$true] %s79
      %s81 = sshll.u32 [#allocation7], 4
      %s82 = int_to_ptr.vmem [resolvable:$true] %s81
      %87 = dma.hbm_to_vmem [thread:$0]  %s80, 512, %s82, [#allocation6], 128, 128, 8
    $region57: #{decoder_simple_forward.1} parent=1 // pred_fallthru
      _
    // Predicated region
    $region58: #{decoder_simple_forward.1} parent=1 // pred_check
      _
    $region59: #{decoder_simple_forward.1} parent=1 // pred_check_branch
      %89 = sbr.rel (0) target = $region61
    $region60: #{decoder_simple_forward.1} parent=1 // pred_region
      %91 = vsyncadd [#allocation9], 0
      %s92 = sshll.u32 %s14, 4
      %s93 = int_to_ptr.hbm [resolvable:$true] %s92
      %s94 = sshll.u32 [#allocation8], 4
      %s95 = int_to_ptr.vmem [resolvable:$true] %s94
      %100 = dma.hbm_to_vmem [thread:$0]  %s93, 512, %s95, [#allocation9], 128, 128, 8
    $region61: #{decoder_simple_forward.1} parent=1 // pred_fallthru
      _
    // Predicated region
    $region62: #{decoder_simple_forward.1} parent=1 // pred_check
      _
    $region63: #{decoder_simple_forward.1} parent=1 // pred_check_branch
      %102 = sbr.rel (0) target = $region65
    $region64: #{decoder_simple_forward.1} parent=1 // pred_region
      _
    $region65: #{decoder_simple_forward.1} parent=1 // pred_fallthru
      _
    // Predicated region
    $region66: #{decoder_simple_forward.1} parent=1 // pred_check
      _
    $region67: #{decoder_simple_forward.1} parent=1 // pred_check_branch
      %104 = sbr.rel (0) target = $region69
    $region68: #{decoder_simple_forward.1} parent=1 // pred_region
      %106 = dma.done [#allocation3], 512
    $region69: #{decoder_simple_forward.1} parent=1 // pred_fallthru
      _
    // Predicated region
    $region70: #{decoder_simple_forward.1} parent=1 // pred_check
      _
    $region71: #{decoder_simple_forward.1} parent=1 // pred_check_branch
      %108 = sbr.rel (0) target = $region73
    $region72: #{decoder_simple_forward.1} parent=1 // pred_region
      %110 = dma.done [#allocation6], 512
    $region73: #{decoder_simple_forward.1} parent=1 // pred_fallthru
      _
    // Predicated region
    $region74: #{decoder_simple_forward.1} parent=1 // pred_check
      _
    $region75: #{decoder_simple_forward.1} parent=1 // pred_check_branch
      %112 = sbr.rel (0) target = $region77
    $region76: #{decoder_simple_forward.1} parent=1 // pred_region
      %114 = dma.done [#allocation6], 512
    $region77: #{decoder_simple_forward.1} parent=1 // pred_fallthru
      _
    // Predicated region
    $region78: #{decoder_simple_forward.1} parent=1 // pred_check
      _
    $region79: #{decoder_simple_forward.1} parent=1 // pred_check_branch
      %116 = sbr.rel (0) target = $region81
    $region80: #{decoder_simple_forward.1} parent=1 // pred_region
      %118 = dma.done [#allocation9], 512
    $region81: #{decoder_simple_forward.1} parent=1 // pred_fallthru
      _
    %v119 = vld [vmem:[%s0] sm:$0x3]
    %vm120 = vcmp.ge.s32.totalorder %v119, 24
    %v121 = vsel %vm120, 23, %v119
    %v122 = vlaneseq
    %v123 = vand.u32 %v122, 127
    %124 = vset.pattern.permute.xlu0 0
    %125 = vperm.xlu0 %124, %v121
    %v126 = vpop.permute.xlu0 %125
    %vm127 = vcmp.eq.s32.totalorder %v123, %v126
    %v128 = vsel %vm127, 1, 0
    %v129 = vcvt.s32.f32 %v128
    %v130 = vld [vmem:[%s2] sm:$0xff]
    %v131 = vld [vmem:[%s2 + $0x8] sm:$0xff]
    %v132 = vld [vmem:[%s2 + $0x10] sm:$0xff]
    %vm133 = vcmask 195584
    %v135 = vsel %vm133, %v129, 0
    %137 = vmatpush.msra.mxu0 0.0
    %138 = vmatpush.msra.mxu0 0.0
    %139 = vmatpush.msra.mxu0 0.0
    %140 = vmatpush.msra.mxu0 0.0
    %141 = vmatpush.msra.mxu0 0.0
    %142 = vmatpush.msra.mxu0 0.0
    %143 = vmatpush.msra.mxu0 0.0
    %144 = vmatpush.msra.mxu0 0.0
    %145 = vmatpush.msra.mxu0 0.0
    %146 = vmatpush.msra.mxu0 0.0
    %147 = vmatpush.msra.mxu0 0.0
    %148 = vmatpush.msra.mxu0 0.0
    %149 = vmatpush.msra.mxu0 0.0
    %150 = vmatpush.msra.mxu0 %v132
    %151 = vmatpush.msra.mxu0 %v131
    %152 = vmatpush.msra.mxu0 %v130
    %153 = vmatmul.f32.gmra.mxu0 %v135
    %v154 = vpop.f32.mrf.mxu0
    %v155 = vadd.f32 0.0, %v154
    %156 = vdwg.mxu0
    %v157 = vld [vmem:[%s1] sm:$0x3]
    %vm158 = vcmp.ge.s32.totalorder %v157, 32
    %v159 = vsel %vm158, 28, %v157
    %160 = vset.pattern.permute.xlu0 0
    %161 = vperm.xlu0 %160, %v159
    %v162 = vpop.permute.xlu0 %161
    %vm163 = vcmp.eq.s32.totalorder %v123, %v162
    %v164 = vsel %vm163, 1, 0
    %v165 = vcvt.s32.f32 %v164
    %v166 = vld [vmem:[%s3] sm:$0xff]
    %v167 = vld [vmem:[%s3 + $0x8] sm:$0xff]
    %v168 = vld [vmem:[%s3 + $0x10] sm:$0xff]
    %v169 = vld [vmem:[%s3 + $0x18] sm:$0xff]
    %vm170 = vcmask 261120
    %v172 = vsel %vm170, %v165, 0
    %174 = vmatpush.msra.mxu0 0.0
    %175 = vmatpush.msra.mxu0 0.0
    %176 = vmatpush.msra.mxu0 0.0
    %177 = vmatpush.msra.mxu0 0.0
    %178 = vmatpush.msra.mxu0 0.0
    %179 = vmatpush.msra.mxu0 0.0
    %180 = vmatpush.msra.mxu0 0.0
    %181 = vmatpush.msra.mxu0 0.0
    %182 = vmatpush.msra.mxu0 0.0
    %183 = vmatpush.msra.mxu0 0.0
    %184 = vmatpush.msra.mxu0 0.0
    %185 = vmatpush.msra.mxu0 0.0
    %186 = vmatpush.msra.mxu0 %v169
    %187 = vmatpush.msra.mxu0 %v168
    %188 = vmatpush.msra.mxu0 %v167
    %189 = vmatpush.msra.mxu0 %v166
    %190 = vmatmul.f32.gmra.mxu0 %v172
    %v191 = vpop.f32.mrf.mxu0
    %v192 = vadd.f32 0.0, %v191
    %193 = vdwg.mxu0
    %195 = vrot.lane.b32.xlu0 %v192, 16
    %v196 = vpop.permute.xlu0 %195
    %vm198 = vcmask 130048
    %v199 = vsel %vm198, %v155, %v196
    %v200 = vld [vmem:[%s4] sm:$0x3]
    %v201 = vld [vmem:[%s5] sm:$0x3]
    %v202 = vld [vmem:[%s7] sm:$0xff]
    %v203 = vld [vmem:[%s7 + $0x8] sm:$0xff]
    %v204 = vld [vmem:[%s7 + $0x10] sm:$0xff]
    %v205 = vld [vmem:[%s7 + $0x18] sm:$0xff]
    %v206 = vld [vmem:[%s8] sm:$0xff]
    %v207 = vld [vmem:[%s8 + $0x8] sm:$0xff]
    %v208 = vld [vmem:[%s8 + $0x10] sm:$0xff]
    %v209 = vld [vmem:[%s8 + $0x18] sm:$0xff]
    %v210 = vld [vmem:[%s9] sm:$0x1]
    %v212 = vsel %vm170, %v200, 0
    %214 = vmatpush.msra.mxu0 0.0
    %215 = vmatpush.msra.mxu0 0.0
    %216 = vmatpush.msra.mxu0 0.0
    %217 = vmatpush.msra.mxu0 0.0
    %218 = vmatpush.msra.mxu0 0.0
    %219 = vmatpush.msra.mxu0 0.0
    %220 = vmatpush.msra.mxu0 0.0
    %221 = vmatpush.msra.mxu0 0.0
    %222 = vmatpush.msra.mxu0 0.0
    %223 = vmatpush.msra.mxu0 0.0
    %224 = vmatpush.msra.mxu0 0.0
    %225 = vmatpush.msra.mxu0 0.0
    %226 = vmatpush.msra.mxu0 %v209
    %227 = vmatpush.msra.mxu0 %v208
    %228 = vmatpush.msra.mxu0 %v207
    %229 = vmatpush.msra.mxu0 %v206
    %230 = vmatmul.f32.gmra.mxu0 %v212
    %v231 = vpop.f32.mrf.mxu0
    %v232 = vadd.f32 0.0, %v231
    %233 = vdwg.mxu0
    %v235 = vsel %vm170, %v199, 0
    %237 = vmatpush.msra.mxu0 0.0
    %238 = vmatpush.msra.mxu0 0.0
    %239 = vmatpush.msra.mxu0 0.0
    %240 = vmatpush.msra.mxu0 0.0
    %241 = vmatpush.msra.mxu0 0.0
    %242 = vmatpush.msra.mxu0 0.0
    %243 = vmatpush.msra.mxu0 0.0
    %244 = vmatpush.msra.mxu0 0.0
    %245 = vmatpush.msra.mxu0 0.0
    %246 = vmatpush.msra.mxu0 0.0
    %247 = vmatpush.msra.mxu0 0.0
    %248 = vmatpush.msra.mxu0 0.0
    %249 = vmatpush.msra.mxu0 %v205
    %250 = vmatpush.msra.mxu0 %v204
    %251 = vmatpush.msra.mxu0 %v203
    %252 = vmatpush.msra.mxu0 %v202
    %253 = vmatmul.f32.gmra.mxu0 %v235
    %v254 = vpop.f32.mrf.mxu0
    %v255 = vadd.f32 %v232, %v254
    %256 = vdwg.mxu0
    %v258 = vperm.slane %v210, 0
    %v260 = vadd.f32 %v255, %v258
    %vm261 = vcmp.ge.s32.totalorder %v123, 64
    %vm262 = vcmp.lt.s32.totalorder %v123, 96
    %vm263 = vmand %vm261, %vm262
    %v264 = vtanh.pop %v260
    %v265 = vxor.u32 %v260, 2147483648
    %v266 = vmul.f32 %v265, 1.442695
    %v267 = vpow.pop %v266
    %v268 = vadd.f32 %v267, 1.0
    %v269 = vrcp.pop %v268
    %v270 = vmul.f32 %v268, %v269
    %v271 = vsub.f32 1.0, %v270
    %v272 = vmul.f32 %v269, %v271
    %v273 = vadd.f32 %v269, %v272
    %vm274 = vweird.f32 %v268
    %vm275 = vweird.f32 %v269
    %vm276 = vmor %vm274, %vm275
    %v277 = vsel %vm276, %v269, %v273
    %v278 = vand.u32 2147483647, %v268
    %vm279 = vcmp.eq.f32.partialorder %v278, 8.507059e+37
    %v280 = vand.u32 %v268, 2147483648
    %v281 = vor.u32 1.1754944e-38, %v280
    %v282 = vsel %vm279, %v281, %v277
    %v283 = vmul.f32 1.0, %v282
    %v284 = vsel %vm263, %v264, %v283
    %286 = vrot.lane.b32.xlu0 %v201, 32
    %v287 = vpop.permute.xlu0 %286
    %v289 = vmul.f32 %v284, %v287
    %291 = vrot.lane.b32.xlu0 %v284, 64
    %v292 = vpop.permute.xlu0 %291
    %v294 = vmul.f32 %v284, %v292
    %296 = vrot.lane.b32.xlu0 %v294, 32
    %v297 = vpop.permute.xlu0 %296
    %v299 = vadd.f32 %v289, %v297
    %v300 = vtanh.pop %v299
    %302 = vrot.lane.b32.xlu0 %v300, 64
    %v303 = vpop.permute.xlu0 %302
    %v305 = vmul.f32 %v284, %v303
    %s306 = scalar_lea.vmem %s4, 2
    %v307 = vld [vmem:[%s306] sm:$0x3]
    %s308 = scalar_lea.vmem %s5, 2
    %v309 = vld [vmem:[%s308] sm:$0x3]
    %v310 = vld [vmem:[#allocation2] sm:$0xff]
    %v311 = vld [vmem:[#allocation2 + $0x8] sm:$0xff]
    %v312 = vld [vmem:[#allocation2 + $0x10] sm:$0xff]
    %v313 = vld [vmem:[#allocation2 + $0x18] sm:$0xff]
    %v314 = vld [vmem:[#allocation5] sm:$0xff]
    %v315 = vld [vmem:[#allocation5 + $0x8] sm:$0xff]
    %v316 = vld [vmem:[#allocation5 + $0x10] sm:$0xff]
    %v317 = vld [vmem:[#allocation5 + $0x18] sm:$0xff]
    %v318 = vld [vmem:[%s12] sm:$0x1]
    %v320 = vsel %vm170, %v307, 0
    %322 = vmatpush.msra.mxu0 0.0
    %323 = vmatpush.msra.mxu0 0.0
    %324 = vmatpush.msra.mxu0 0.0
    %325 = vmatpush.msra.mxu0 0.0
    %326 = vmatpush.msra.mxu0 0.0
    %327 = vmatpush.msra.mxu0 0.0
    %328 = vmatpush.msra.mxu0 0.0
    %329 = vmatpush.msra.mxu0 0.0
    %330 = vmatpush.msra.mxu0 0.0
    %331 = vmatpush.msra.mxu0 0.0
    %332 = vmatpush.msra.mxu0 0.0
    %333 = vmatpush.msra.mxu0 0.0
    %334 = vmatpush.msra.mxu0 %v317
    %335 = vmatpush.msra.mxu0 %v316
    %336 = vmatpush.msra.mxu0 %v315
    %337 = vmatpush.msra.mxu0 %v314
    %338 = vmatmul.f32.gmra.mxu0 %v320
    %v339 = vpop.f32.mrf.mxu0
    %v340 = vadd.f32 0.0, %v339
    %341 = vdwg.mxu0
    %343 = vrot.lane.b32.xlu0 %v305, 32
    %v344 = vpop.permute.xlu0 %343
    %v345 = vsel %vm170, %v344, 0
    %347 = vmatpush.msra.mxu0 0.0
    %348 = vmatpush.msra.mxu0 0.0
    %349 = vmatpush.msra.mxu0 0.0
    %350 = vmatpush.msra.mxu0 0.0
    %351 = vmatpush.msra.mxu0 0.0
    %352 = vmatpush.msra.mxu0 0.0
    %353 = vmatpush.msra.mxu0 0.0
    %354 = vmatpush.msra.mxu0 0.0
    %355 = vmatpush.msra.mxu0 0.0
    %356 = vmatpush.msra.mxu0 0.0
    %357 = vmatpush.msra.mxu0 0.0
    %358 = vmatpush.msra.mxu0 0.0
    %359 = vmatpush.msra.mxu0 %v313
    %360 = vmatpush.msra.mxu0 %v312
    %361 = vmatpush.msra.mxu0 %v311
    %362 = vmatpush.msra.mxu0 %v310
    %363 = vmatmul.f32.gmra.mxu0 %v345
    %v364 = vpop.f32.mrf.mxu0
    %v365 = vadd.f32 %v340, %v364
    %366 = vdwg.mxu0
    %v368 = vperm.slane %v318, 0
    %v370 = vadd.f32 %v365, %v368
    %v371 = vtanh.pop %v370
    %v372 = vxor.u32 %v370, 2147483648
    %v373 = vmul.f32 %v372, 1.442695
    %v374 = vpow.pop %v373
    %v375 = vadd.f32 %v374, 1.0
    %v376 = vrcp.pop %v375
    %v377 = vmul.f32 %v375, %v376
    %v378 = vsub.f32 1.0, %v377
    %v379 = vmul.f32 %v376, %v378
    %v380 = vadd.f32 %v376, %v379
    %vm381 = vweird.f32 %v375
    %vm382 = vweird.f32 %v376
    %vm383 = vmor %vm381, %vm382
    %v384 = vsel %vm383, %v376, %v380
    %v385 = vand.u32 2147483647, %v375
    %vm386 = vcmp.eq.f32.partialorder %v385, 8.507059e+37
    %v387 = vand.u32 %v375, 2147483648
    %v388 = vor.u32 1.1754944e-38, %v387
    %v389 = vsel %vm386, %v388, %v384
    %v390 = vmul.f32 1.0, %v389
    %v391 = vsel %vm263, %v371, %v390
    %393 = vrot.lane.b32.xlu0 %v309, 32
    %v394 = vpop.permute.xlu0 %393
    %v396 = vmul.f32 %v391, %v394
    %398 = vrot.lane.b32.xlu0 %v391, 64
    %v399 = vpop.permute.xlu0 %398
    %v401 = vmul.f32 %v391, %v399
    %403 = vrot.lane.b32.xlu0 %v401, 32
    %v404 = vpop.permute.xlu0 %403
    %v406 = vadd.f32 %v396, %v404
    %v407 = vtanh.pop %v406
    %409 = vrot.lane.b32.xlu0 %v407, 64
    %v410 = vpop.permute.xlu0 %409
    %v412 = vmul.f32 %v391, %v410
    %v413 = vld [vmem:[#allocation7] sm:$0xff]
    %v414 = vld [vmem:[#allocation7 + $0x8] sm:$0xff]
    %v415 = vld [vmem:[#allocation7 + $0x10] sm:$0xff]
    %v416 = vld [vmem:[#allocation7 + $0x18] sm:$0xff]
    %v417 = vld [vmem:[%s6] sm:$0x3]
    %v418 = vld [vmem:[#allocation8] sm:$0xff]
    %v419 = vld [vmem:[#allocation8 + $0x8] sm:$0xff]
    %v420 = vld [vmem:[#allocation8 + $0x10] sm:$0xff]
    %v421 = vld [vmem:[#allocation8 + $0x18] sm:$0xff]
    %v423 = vsel %vm170, %v417, 0
    %425 = vmatpush.msra.mxu0 0.0
    %426 = vmatpush.msra.mxu0 0.0
    %427 = vmatpush.msra.mxu0 0.0
    %428 = vmatpush.msra.mxu0 0.0
    %429 = vmatpush.msra.mxu0 0.0
    %430 = vmatpush.msra.mxu0 0.0
    %431 = vmatpush.msra.mxu0 0.0
    %432 = vmatpush.msra.mxu0 0.0
    %433 = vmatpush.msra.mxu0 0.0
    %434 = vmatpush.msra.mxu0 0.0
    %435 = vmatpush.msra.mxu0 0.0
    %436 = vmatpush.msra.mxu0 0.0
    %437 = vmatpush.msra.mxu0 %v421
    %438 = vmatpush.msra.mxu0 %v420
    %439 = vmatpush.msra.mxu0 %v419
    %440 = vmatpush.msra.mxu0 %v418
    %441 = vmatmul.f32.gmra.mxu0 %v423
    %v442 = vpop.f32.mrf.mxu0
    %v443 = vadd.f32 0.0, %v442
    %444 = vdwg.mxu0
    %446 = vrot.lane.b32.xlu0 %v412, 32
    %v447 = vpop.permute.xlu0 %446
    %v448 = vsel %vm170, %v447, 0
    %450 = vmatpush.msra.mxu0 0.0
    %451 = vmatpush.msra.mxu0 0.0
    %452 = vmatpush.msra.mxu0 0.0
    %453 = vmatpush.msra.mxu0 0.0
    %454 = vmatpush.msra.mxu0 0.0
    %455 = vmatpush.msra.mxu0 0.0
    %456 = vmatpush.msra.mxu0 0.0
    %457 = vmatpush.msra.mxu0 0.0
    %458 = vmatpush.msra.mxu0 0.0
    %459 = vmatpush.msra.mxu0 0.0
    %460 = vmatpush.msra.mxu0 0.0
    %461 = vmatpush.msra.mxu0 0.0
    %462 = vmatpush.msra.mxu0 %v416
    %463 = vmatpush.msra.mxu0 %v415
    %464 = vmatpush.msra.mxu0 %v414
    %465 = vmatpush.msra.mxu0 %v413
    %466 = vmatmul.f32.gmra.mxu0 %v448
    %v467 = vpop.f32.mrf.mxu0
    %v468 = vadd.f32 %v443, %v467
    %469 = vdwg.mxu0
    %v470 = vld [vmem:[%s15] sm:$0x1]
    %v472 = vperm.slane %v470, 0
    %v474 = vadd.f32 %v468, %v472
    %vm475 = vcmask 254976
    %v476 = vsel %vm475, %v474, -inf
    %477 = vmax.xlane.f32.xlu0 %v476
    %v478 = vpop.xlane.xlu0 %477
    %v479 = vsub.f32 %v474, %v478
    %v480 = vmul.f32 %v479, 1.442695
    %v481 = vpow.pop %v480
    %v482 = vsel %vm475, %v481, 0.0
    %483 = vadd.xlane.f32.xlu0 %v482
    %v484 = vpop.xlane.xlu0 %483
    %v485 = vlog2.pop %v484
    %v486 = vmul.f32 %v485, 0.6931472
    %v487 = vadd.f32 %v486, %v478
    %v488 = vsub.f32 %v474, %v487
    %489 = vst.msk [vmem:[#allocation10] sm:$0x3] %vm475, %v488
    %491 = vrot.lane.b32.xlu0 %v412, 96
    %v492 = vpop.permute.xlu0 %491
    %495 = vrot.lane.b32.xlu0 %v406, 64
    %v496 = vpop.permute.xlu0 %495
    %v498 = vsel %vm170, %v344, %v299
    %vm499 = vcmask 523264
    %v500 = vsel %vm499, %v498, %v492
    %vm501 = vcmask 785408
    %v502 = vsel %vm501, %v500, %v496
    %503 = vst [vmem:[%s17] sm:$0x3] %v502
    // Predicated region
    $region82: #{decoder_simple_forward.1} parent=1 // pred_check
      _
    $region83: #{decoder_simple_forward.1} parent=1 // pred_check_branch
      %505 = sbr.rel (0) target = $region85
    $region84: #{decoder_simple_forward.1} parent=1 // pred_region
      %507 = vsyncadd [#allocation4], 0
      %s509 = sshll.u32 [#allocation10], 4
      %s510 = int_to_ptr.vmem [resolvable:$true] %s509
      %s511 = sshll.u32 %s16, 4
      %s512 = int_to_ptr.hbm [resolvable:$true] %s511
      %514 = dma.vmem_to_hbm [thread:$0]  %s510, 32, %s512, [#allocation4]
    $region85: #{decoder_simple_forward.1} parent=1 // pred_fallthru
      _
    // Predicated region
    $region86: #{decoder_simple_forward.1} parent=1 // pred_check
      _
    $region87: #{decoder_simple_forward.1} parent=1 // pred_check_branch
      %516 = sbr.rel (0) target = $region89
    $region88: #{decoder_simple_forward.1} parent=1 // pred_region
      _
    $region89: #{decoder_simple_forward.1} parent=1 // pred_fallthru
      _
    // Predicated region
    $region90: #{decoder_simple_forward.1} parent=1 // pred_check
      _
    $region91: #{decoder_simple_forward.1} parent=1 // pred_check_branch
      %518 = sbr.rel (0) target = $region93
    $region92: #{decoder_simple_forward.1} parent=1 // pred_region
      %520 = dma.done [#allocation4], 32
    $region93: #{decoder_simple_forward.1} parent=1 // pred_fallthru
      _
    // Predicated region
    $region94: #{decoder_simple_forward.1} parent=1 // pred_check
      _
    $region95: #{decoder_simple_forward.1} parent=1 // pred_check_branch
      %522 = sbr.rel (0) target = $region97
    $region96: #{decoder_simple_forward.1} parent=1 // pred_region
      _
    $region97: #{decoder_simple_forward.1} parent=1 // pred_fallthru
      _
    %523 = vsyncpa [#allocation3], 1
    %524 = vsyncpa [#allocation6], 1
    %525 = vsyncpa [#allocation9], 1
    %526 = vsyncpa [#allocation4], 1

</llo_original>
